<compile_context>
chip_gen: v7x
topology: tpu7x:2x2x1
jax: 0.10.0
libtpu: 0.0.40
codegen_flags: <defaults>
</compile_context>

<pallas_src>
import jax
import jax.numpy as jnp
from jax.experimental import pallas as pl
from jax.experimental.pallas import tpu as pltpu


def _make_prompt_kernel(bm, n_prefix, n_cls):
    def kernel(label_ref, template_ref, cls_hbm, out_ref, cls_buf, sems):
        # label_ref: (b_pad,) int32 in SMEM (scalar prefetch)
        # template_ref: (1, seq, d) VMEM block (prefix+suffix pre-baked)
        # cls_hbm: (num_class, n_cls, d) raw HBM ref (memory_space=pl.ANY)
        # out_ref: (bm, seq, d) VMEM output block
        # cls_buf: (bm, n_cls, d) VMEM scratch, sems: (bm,) DMA semaphores
        base = pl.program_id(0) * bm

        # 1) Kick off the BM label-dependent class-context gathers (HBM->VMEM).
        copies = []
        for r in range(bm):
            lbl = label_ref[base + r]
            cp = pltpu.make_async_copy(cls_hbm.at[lbl], cls_buf.at[r], sems.at[r])
            cp.start()
            copies.append(cp)

        # 2) While the gathers are in flight, fill the whole output block from
        #    the template (unmasked, lane-dense, full-row stores).
        tmpl = template_ref[0]
        for r in range(bm):
            out_ref[r] = tmpl

        # 3) Wait for the gathers and drop the class contexts in with a single
        #    blocked store over the small (n_cls-row) region.
        for cp in copies:
            cp.wait()
        out_ref[:, n_prefix:n_prefix + n_cls, :] = cls_buf[...]

    return kernel


def prompt_learner_forward(label, cls_ctx, token_prefix, token_suffix, *, bm=8):
    """prompts = cat([prefix.expand(b), cls_ctx[label], suffix.expand(b)], dim=1).

    label:        (b,) int indices into cls_ctx
    cls_ctx:      (num_class, n_cls_ctx, ctx_dim)  learnable class context
    token_prefix: (1, n_prefix, ctx_dim)           frozen prompt prefix embedding
    token_suffix: (1, n_suffix, ctx_dim)           frozen prompt suffix embedding
    bm:           batch rows processed per grid step
    returns:      (b, n_prefix + n_cls_ctx + n_suffix, ctx_dim)
    """
    b = label.shape[0]
    _, n_cls, d = cls_ctx.shape
    n_prefix = token_prefix.shape[1]
    n_suffix = token_suffix.shape[1]
    seq = n_prefix + n_cls + n_suffix
    dtype = cls_ctx.dtype

    bm = max(1, min(bm, b))
    n_blocks = pl.cdiv(b, bm)
    b_pad = n_blocks * bm

    label = label.astype(jnp.int32)
    if b_pad != b:
        # Pad with label 0 (valid gather); padded output rows are sliced off.
        label = jnp.concatenate([label, jnp.zeros((b_pad - b,), jnp.int32)])

    # Prompt template: prefix and suffix already in place, cls region zeroed
    # (it is overwritten in the kernel). Constant block index -> DMA'd once.
    template = jnp.concatenate(
        [
            token_prefix.astype(dtype),
            jnp.zeros((1, n_cls, d), dtype),
            token_suffix.astype(dtype),
        ],
        axis=1,
    )

    kernel = _make_prompt_kernel(bm, n_prefix, n_cls)

    out = pl.pallas_call(
        kernel,
        out_shape=jax.ShapeDtypeStruct((b_pad, seq, d), dtype),
        grid_spec=pltpu.PrefetchScalarGridSpec(
            num_scalar_prefetch=1,
            grid=(n_blocks,),
            in_specs=[
                # Template: same (only) block every step.
                pl.BlockSpec((1, seq, d), lambda i, lbl: (0, 0, 0)),
                # cls_ctx: raw HBM ref, gathered manually per row in the kernel.
                pl.BlockSpec(memory_space=pl.ANY),
            ],
            out_specs=pl.BlockSpec((bm, seq, d), lambda i, lbl: (i, 0, 0)),
            scratch_shapes=[
                pltpu.VMEM((bm, n_cls, d), dtype),
                pltpu.SemaphoreType.DMA((bm,)),
            ],
        ),
        compiler_params=pltpu.CompilerParams(
            dimension_semantics=("parallel",),
        ),
    )(label, template, cls_ctx)

    return out[:b] if b_pad != b else out


if __name__ == "__main__":
    # Shapes implied by the module: ctx_dim=512, CLIP seq len 77,
    # n_ctx=4 -> prefix has 5 tokens, n_cls_ctx=4 -> suffix has 68 tokens.
    num_class, n_cls_ctx, ctx_dim = 8, 4, 512
    n_ctx = 4
    seq_len = 77
    n_prefix = n_ctx + 1                       # 5
    n_suffix = seq_len - n_prefix - n_cls_ctx  # 68
    b = 10                                     # exercises blocking (bm=4) + padding

    key = jax.random.PRNGKey(0)
    k1, k2, k3, k4 = jax.random.split(key, 4)
    # TODO(synk): clip.tokenize + token_embedding lookup are init-time, host-side;
    # here the resulting prefix/suffix buffers are synthesized directly.
    cls_ctx = 0.02 * jax.random.normal(k1, (num_class, n_cls_ctx, ctx_dim), jnp.float32)
    token_prefix = jax.random.normal(k2, (1, n_prefix, ctx_dim), jnp.float32)
    token_suffix = jax.random.normal(k3, (1, n_suffix, ctx_dim), jnp.float32)
    label = jax.random.randint(k4, (b,), 0, num_class, dtype=jnp.int32)

    prompts = jax.block_until_ready(
        prompt_learner_forward(label, cls_ctx, token_prefix, token_suffix, bm=4)
    )

    # pure-JAX reference (identical math to the PyTorch forward)
    ref = jnp.concatenate(
        [
            jnp.broadcast_to(token_prefix, (b, n_prefix, ctx_dim)),
            cls_ctx[label],
            jnp.broadcast_to(token_suffix, (b, n_suffix, ctx_dim)),
        ],
        axis=1,
    )

    assert prompts.shape == (b, seq_len, ctx_dim)
    assert prompts.dtype == cls_ctx.dtype
    assert bool(jnp.array_equal(prompts, ref)), "mismatch vs reference"
    print("KERNEL_OK")
</pallas_src>

<mosaic_0001>
module attributes {stable_mosaic.version = 11 : i64} {
  func.func @kernel(%arg0: i32, %arg1: memref<12xi32, #tpu.memory_space<smem>>, %arg2: memref<1x77x512xf32, #tpu.memory_space<vmem>>, %arg3: memref<8x4x512xf32, #tpu.memory_space<any>>, %arg4: memref<4x77x512xf32, #tpu.memory_space<vmem>>, %arg5: memref<4x4x512xf32, #tpu.memory_space<vmem>>, %arg6: memref<4x!tpu.dma_semaphore, #tpu.memory_space<semaphore_mem>>) attributes {dimension_semantics = [#tpu.dimension_semantics<parallel>], iteration_bounds = array<i64: 3>, scalar_prefetch = 1 : i64, scratch_operands = 2 : i64, tpu.core_type = #tpu.core_type<tc>, window_params = [{pipeline_mode = #tpu.pipeline_mode<synchronous>, transform_indices = @transform_0, window_bounds = array<i64: 1, 77, 512>}, {}, {transform_indices = @transform_2, window_bounds = array<i64: 4, 77, 512>}]} {
    %c4_i32 = arith.constant 4 : i32
    %0 = arith.muli %arg0, %c4_i32 : i32
    %c0_i32 = arith.constant 0 : i32
    %1 = arith.addi %0, %c0_i32 : i32
    %2 = arith.index_cast %1 : i32 to index
    %3 = memref.load %arg1[%2] : memref<12xi32, #tpu.memory_space<smem>>
    %c0_i32_0 = arith.constant 0 : i32
    %c0_i32_1 = arith.constant 0 : i32
    %c0_i32_2 = arith.constant 0 : i32
    %c0_i32_3 = arith.constant 0 : i32
    %4 = tpu.memref_slice %arg3[%3, %c0_i32_2, %c0_i32_3] : memref<8x4x512xf32, #tpu.memory_space<any>> -> memref<1x4x512xf32, #tpu.memory_space<any>>
    %5 = tpu.memref_squeeze %4 : memref<1x4x512xf32, #tpu.memory_space<any>> -> memref<4x512xf32, #tpu.memory_space<any>>
    %c0_i32_4 = arith.constant 0 : i32
    %c0_i32_5 = arith.constant 0 : i32
    %6 = tpu.memref_slice %arg5[%c0_i32_0, %c0_i32_4, %c0_i32_5] : memref<4x4x512xf32, #tpu.memory_space<vmem>> -> memref<1x4x512xf32, #tpu.memory_space<vmem>>
    %7 = tpu.memref_squeeze %6 : memref<1x4x512xf32, #tpu.memory_space<vmem>> -> memref<4x512xf32, #tpu.memory_space<vmem>>
    %8 = tpu.memref_slice %arg6[%c0_i32_1] : memref<4x!tpu.dma_semaphore, #tpu.memory_space<semaphore_mem>> -> memref<1x!tpu.dma_semaphore, #tpu.memory_space<semaphore_mem>>
    %9 = tpu.memref_squeeze %8 : memref<1x!tpu.dma_semaphore, #tpu.memory_space<semaphore_mem>> -> memref<!tpu.dma_semaphore, #tpu.memory_space<semaphore_mem>>
    tpu.enqueue_dma source(%5 : memref<4x512xf32, #tpu.memory_space<any>>) target(%7 : memref<4x512xf32, #tpu.memory_space<vmem>>) target_semaphore(%9 : memref<!tpu.dma_semaphore, #tpu.memory_space<semaphore_mem>>)
    %c1_i32 = arith.constant 1 : i32
    %10 = arith.addi %0, %c1_i32 : i32
    %11 = arith.index_cast %10 : i32 to index
    %12 = memref.load %arg1[%11] : memref<12xi32, #tpu.memory_space<smem>>
    %c1_i32_6 = arith.constant 1 : i32
    %c1_i32_7 = arith.constant 1 : i32
    %c0_i32_8 = arith.constant 0 : i32
    %c0_i32_9 = arith.constant 0 : i32
    %13 = tpu.memref_slice %arg3[%12, %c0_i32_8, %c0_i32_9] : memref<8x4x512xf32, #tpu.memory_space<any>> -> memref<1x4x512xf32, #tpu.memory_space<any>>
    %14 = tpu.memref_squeeze %13 : memref<1x4x512xf32, #tpu.memory_space<any>> -> memref<4x512xf32, #tpu.memory_space<any>>
    %c0_i32_10 = arith.constant 0 : i32
    %c0_i32_11 = arith.constant 0 : i32
    %15 = tpu.memref_slice %arg5[%c1_i32_6, %c0_i32_10, %c0_i32_11] : memref<4x4x512xf32, #tpu.memory_space<vmem>> -> memref<1x4x512xf32, #tpu.memory_space<vmem>>
    %16 = tpu.memref_squeeze %15 : memref<1x4x512xf32, #tpu.memory_space<vmem>> -> memref<4x512xf32, #tpu.memory_space<vmem>>
    %17 = tpu.memref_slice %arg6[%c1_i32_7] : memref<4x!tpu.dma_semaphore, #tpu.memory_space<semaphore_mem>> -> memref<1x!tpu.dma_semaphore, #tpu.memory_space<semaphore_mem>>
    %18 = tpu.memref_squeeze %17 : memref<1x!tpu.dma_semaphore, #tpu.memory_space<semaphore_mem>> -> memref<!tpu.dma_semaphore, #tpu.memory_space<semaphore_mem>>
    tpu.enqueue_dma source(%14 : memref<4x512xf32, #tpu.memory_space<any>>) target(%16 : memref<4x512xf32, #tpu.memory_space<vmem>>) target_semaphore(%18 : memref<!tpu.dma_semaphore, #tpu.memory_space<semaphore_mem>>)
    %c2_i32 = arith.constant 2 : i32
    %19 = arith.addi %0, %c2_i32 : i32
    %20 = arith.index_cast %19 : i32 to index
    %21 = memref.load %arg1[%20] : memref<12xi32, #tpu.memory_space<smem>>
    %c2_i32_12 = arith.constant 2 : i32
    %c2_i32_13 = arith.constant 2 : i32
    %c0_i32_14 = arith.constant 0 : i32
    %c0_i32_15 = arith.constant 0 : i32
    %22 = tpu.memref_slice %arg3[%21, %c0_i32_14, %c0_i32_15] : memref<8x4x512xf32, #tpu.memory_space<any>> -> memref<1x4x512xf32, #tpu.memory_space<any>>
    %23 = tpu.memref_squeeze %22 : memref<1x4x512xf32, #tpu.memory_space<any>> -> memref<4x512xf32, #tpu.memory_space<any>>
    %c0_i32_16 = arith.constant 0 : i32
    %c0_i32_17 = arith.constant 0 : i32
    %24 = tpu.memref_slice %arg5[%c2_i32_12, %c0_i32_16, %c0_i32_17] : memref<4x4x512xf32, #tpu.memory_space<vmem>> -> memref<1x4x512xf32, #tpu.memory_space<vmem>>
    %25 = tpu.memref_squeeze %24 : memref<1x4x512xf32, #tpu.memory_space<vmem>> -> memref<4x512xf32, #tpu.memory_space<vmem>>
    %26 = tpu.memref_slice %arg6[%c2_i32_13] : memref<4x!tpu.dma_semaphore, #tpu.memory_space<semaphore_mem>> -> memref<1x!tpu.dma_semaphore, #tpu.memory_space<semaphore_mem>>
    %27 = tpu.memref_squeeze %26 : memref<1x!tpu.dma_semaphore, #tpu.memory_space<semaphore_mem>> -> memref<!tpu.dma_semaphore, #tpu.memory_space<semaphore_mem>>
    tpu.enqueue_dma source(%23 : memref<4x512xf32, #tpu.memory_space<any>>) target(%25 : memref<4x512xf32, #tpu.memory_space<vmem>>) target_semaphore(%27 : memref<!tpu.dma_semaphore, #tpu.memory_space<semaphore_mem>>)
    %c3_i32 = arith.constant 3 : i32
    %28 = arith.addi %0, %c3_i32 : i32
    %29 = arith.index_cast %28 : i32 to index
    %30 = memref.load %arg1[%29] : memref<12xi32, #tpu.memory_space<smem>>
    %c3_i32_18 = arith.constant 3 : i32
    %c3_i32_19 = arith.constant 3 : i32
    %c0_i32_20 = arith.constant 0 : i32
    %c0_i32_21 = arith.constant 0 : i32
    %31 = tpu.memref_slice %arg3[%30, %c0_i32_20, %c0_i32_21] : memref<8x4x512xf32, #tpu.memory_space<any>> -> memref<1x4x512xf32, #tpu.memory_space<any>>
    %32 = tpu.memref_squeeze %31 : memref<1x4x512xf32, #tpu.memory_space<any>> -> memref<4x512xf32, #tpu.memory_space<any>>
    %c0_i32_22 = arith.constant 0 : i32
    %c0_i32_23 = arith.constant 0 : i32
    %33 = tpu.memref_slice %arg5[%c3_i32_18, %c0_i32_22, %c0_i32_23] : memref<4x4x512xf32, #tpu.memory_space<vmem>> -> memref<1x4x512xf32, #tpu.memory_space<vmem>>
    %34 = tpu.memref_squeeze %33 : memref<1x4x512xf32, #tpu.memory_space<vmem>> -> memref<4x512xf32, #tpu.memory_space<vmem>>
    %35 = tpu.memref_slice %arg6[%c3_i32_19] : memref<4x!tpu.dma_semaphore, #tpu.memory_space<semaphore_mem>> -> memref<1x!tpu.dma_semaphore, #tpu.memory_space<semaphore_mem>>
    %36 = tpu.memref_squeeze %35 : memref<1x!tpu.dma_semaphore, #tpu.memory_space<semaphore_mem>> -> memref<!tpu.dma_semaphore, #tpu.memory_space<semaphore_mem>>
    tpu.enqueue_dma source(%32 : memref<4x512xf32, #tpu.memory_space<any>>) target(%34 : memref<4x512xf32, #tpu.memory_space<vmem>>) target_semaphore(%36 : memref<!tpu.dma_semaphore, #tpu.memory_space<semaphore_mem>>)
    %c0 = arith.constant 0 : index
    %c0_24 = arith.constant 0 : index
    %c0_25 = arith.constant 0 : index
    %37 = vector.load %arg2[%c0, %c0_24, %c0_25] : memref<1x77x512xf32, #tpu.memory_space<vmem>>, vector<1x77x512xf32>
    %38 = vector.shape_cast %37 : vector<1x77x512xf32> to vector<77x512xf32>
    %c0_26 = arith.constant 0 : index
    %c0_27 = arith.constant 0 : index
    %c0_28 = arith.constant 0 : index
    %39 = vector.load %arg4[%c0_26, %c0_27, %c0_28] : memref<4x77x512xf32, #tpu.memory_space<vmem>>, vector<1x77x512xf32>
    %40 = vector.shape_cast %39 : vector<1x77x512xf32> to vector<77x512xf32>
    %41 = vector.shape_cast %38 : vector<77x512xf32> to vector<1x77x512xf32>
    tpu.vector_store %arg4[%c0_26, %c0_27, %c0_28], %41 {strides = array<i32>} : memref<4x77x512xf32, #tpu.memory_space<vmem>>, vector<1x77x512xf32>,
    %c1 = arith.constant 1 : index
    %c0_29 = arith.constant 0 : index
    %c0_30 = arith.constant 0 : index
    %42 = vector.load %arg4[%c1, %c0_29, %c0_30] : memref<4x77x512xf32, #tpu.memory_space<vmem>>, vector<1x77x512xf32>
    %43 = vector.shape_cast %42 : vector<1x77x512xf32> to vector<77x512xf32>
    %44 = vector.shape_cast %38 : vector<77x512xf32> to vector<1x77x512xf32>
    tpu.vector_store %arg4[%c1, %c0_29, %c0_30], %44 {strides = array<i32>} : memref<4x77x512xf32, #tpu.memory_space<vmem>>, vector<1x77x512xf32>,
    %c2 = arith.constant 2 : index
    %c0_31 = arith.constant 0 : index
    %c0_32 = arith.constant 0 : index
    %45 = vector.load %arg4[%c2, %c0_31, %c0_32] : memref<4x77x512xf32, #tpu.memory_space<vmem>>, vector<1x77x512xf32>
    %46 = vector.shape_cast %45 : vector<1x77x512xf32> to vector<77x512xf32>
    %47 = vector.shape_cast %38 : vector<77x512xf32> to vector<1x77x512xf32>
    tpu.vector_store %arg4[%c2, %c0_31, %c0_32], %47 {strides = array<i32>} : memref<4x77x512xf32, #tpu.memory_space<vmem>>, vector<1x77x512xf32>,
    %c3 = arith.constant 3 : index
    %c0_33 = arith.constant 0 : index
    %c0_34 = arith.constant 0 : index
    %48 = vector.load %arg4[%c3, %c0_33, %c0_34] : memref<4x77x512xf32, #tpu.memory_space<vmem>>, vector<1x77x512xf32>
    %49 = vector.shape_cast %48 : vector<1x77x512xf32> to vector<77x512xf32>
    %50 = vector.shape_cast %38 : vector<77x512xf32> to vector<1x77x512xf32>
    tpu.vector_store %arg4[%c3, %c0_33, %c0_34], %50 {strides = array<i32>} : memref<4x77x512xf32, #tpu.memory_space<vmem>>, vector<1x77x512xf32>,
    %c0_i32_35 = arith.constant 0 : i32
    %c0_i32_36 = arith.constant 0 : i32
    %c0_i32_37 = arith.constant 0 : i32
    %c0_i32_38 = arith.constant 0 : i32
    %51 = tpu.memref_slice %arg3[%3, %c0_i32_37, %c0_i32_38] : memref<8x4x512xf32, #tpu.memory_space<any>> -> memref<1x4x512xf32, #tpu.memory_space<any>>
    %52 = tpu.memref_squeeze %51 : memref<1x4x512xf32, #tpu.memory_space<any>> -> memref<4x512xf32, #tpu.memory_space<any>>
    %c0_i32_39 = arith.constant 0 : i32
    %c0_i32_40 = arith.constant 0 : i32
    %53 = tpu.memref_slice %arg5[%c0_i32_35, %c0_i32_39, %c0_i32_40] : memref<4x4x512xf32, #tpu.memory_space<vmem>> -> memref<1x4x512xf32, #tpu.memory_space<vmem>>
    %54 = tpu.memref_squeeze %53 : memref<1x4x512xf32, #tpu.memory_space<vmem>> -> memref<4x512xf32, #tpu.memory_space<vmem>>
    %55 = tpu.memref_slice %arg6[%c0_i32_36] : memref<4x!tpu.dma_semaphore, #tpu.memory_space<semaphore_mem>> -> memref<1x!tpu.dma_semaphore, #tpu.memory_space<semaphore_mem>>
    %56 = tpu.memref_squeeze %55 : memref<1x!tpu.dma_semaphore, #tpu.memory_space<semaphore_mem>> -> memref<!tpu.dma_semaphore, #tpu.memory_space<semaphore_mem>>
    tpu.wait_dma2 semaphore(%56 : memref<!tpu.dma_semaphore, #tpu.memory_space<semaphore_mem>>) src(%52 : memref<4x512xf32, #tpu.memory_space<any>>) dst(%54 : memref<4x512xf32, #tpu.memory_space<vmem>>)
    %c1_i32_41 = arith.constant 1 : i32
    %c1_i32_42 = arith.constant 1 : i32
    %c0_i32_43 = arith.constant 0 : i32
    %c0_i32_44 = arith.constant 0 : i32
    %57 = tpu.memref_slice %arg3[%12, %c0_i32_43, %c0_i32_44] : memref<8x4x512xf32, #tpu.memory_space<any>> -> memref<1x4x512xf32, #tpu.memory_space<any>>
    %58 = tpu.memref_squeeze %57 : memref<1x4x512xf32, #tpu.memory_space<any>> -> memref<4x512xf32, #tpu.memory_space<any>>
    %c0_i32_45 = arith.constant 0 : i32
    %c0_i32_46 = arith.constant 0 : i32
    %59 = tpu.memref_slice %arg5[%c1_i32_41, %c0_i32_45, %c0_i32_46] : memref<4x4x512xf32, #tpu.memory_space<vmem>> -> memref<1x4x512xf32, #tpu.memory_space<vmem>>
    %60 = tpu.memref_squeeze %59 : memref<1x4x512xf32, #tpu.memory_space<vmem>> -> memref<4x512xf32, #tpu.memory_space<vmem>>
    %61 = tpu.memref_slice %arg6[%c1_i32_42] : memref<4x!tpu.dma_semaphore, #tpu.memory_space<semaphore_mem>> -> memref<1x!tpu.dma_semaphore, #tpu.memory_space<semaphore_mem>>
    %62 = tpu.memref_squeeze %61 : memref<1x!tpu.dma_semaphore, #tpu.memory_space<semaphore_mem>> -> memref<!tpu.dma_semaphore, #tpu.memory_space<semaphore_mem>>
    tpu.wait_dma2 semaphore(%62 : memref<!tpu.dma_semaphore, #tpu.memory_space<semaphore_mem>>) src(%58 : memref<4x512xf32, #tpu.memory_space<any>>) dst(%60 : memref<4x512xf32, #tpu.memory_space<vmem>>)
    %c2_i32_47 = arith.constant 2 : i32
    %c2_i32_48 = arith.constant 2 : i32
    %c0_i32_49 = arith.constant 0 : i32
    %c0_i32_50 = arith.constant 0 : i32
    %63 = tpu.memref_slice %arg3[%21, %c0_i32_49, %c0_i32_50] : memref<8x4x512xf32, #tpu.memory_space<any>> -> memref<1x4x512xf32, #tpu.memory_space<any>>
    %64 = tpu.memref_squeeze %63 : memref<1x4x512xf32, #tpu.memory_space<any>> -> memref<4x512xf32, #tpu.memory_space<any>>
    %c0_i32_51 = arith.constant 0 : i32
    %c0_i32_52 = arith.constant 0 : i32
    %65 = tpu.memref_slice %arg5[%c2_i32_47, %c0_i32_51, %c0_i32_52] : memref<4x4x512xf32, #tpu.memory_space<vmem>> -> memref<1x4x512xf32, #tpu.memory_space<vmem>>
    %66 = tpu.memref_squeeze %65 : memref<1x4x512xf32, #tpu.memory_space<vmem>> -> memref<4x512xf32, #tpu.memory_space<vmem>>
    %67 = tpu.memref_slice %arg6[%c2_i32_48] : memref<4x!tpu.dma_semaphore, #tpu.memory_space<semaphore_mem>> -> memref<1x!tpu.dma_semaphore, #tpu.memory_space<semaphore_mem>>
    %68 = tpu.memref_squeeze %67 : memref<1x!tpu.dma_semaphore, #tpu.memory_space<semaphore_mem>> -> memref<!tpu.dma_semaphore, #tpu.memory_space<semaphore_mem>>
    tpu.wait_dma2 semaphore(%68 : memref<!tpu.dma_semaphore, #tpu.memory_space<semaphore_mem>>) src(%64 : memref<4x512xf32, #tpu.memory_space<any>>) dst(%66 : memref<4x512xf32, #tpu.memory_space<vmem>>)
    %c3_i32_53 = arith.constant 3 : i32
    %c3_i32_54 = arith.constant 3 : i32
    %c0_i32_55 = arith.constant 0 : i32
    %c0_i32_56 = arith.constant 0 : i32
    %69 = tpu.memref_slice %arg3[%30, %c0_i32_55, %c0_i32_56] : memref<8x4x512xf32, #tpu.memory_space<any>> -> memref<1x4x512xf32, #tpu.memory_space<any>>
    %70 = tpu.memref_squeeze %69 : memref<1x4x512xf32, #tpu.memory_space<any>> -> memref<4x512xf32, #tpu.memory_space<any>>
    %c0_i32_57 = arith.constant 0 : i32
    %c0_i32_58 = arith.constant 0 : i32
    %71 = tpu.memref_slice %arg5[%c3_i32_53, %c0_i32_57, %c0_i32_58] : memref<4x4x512xf32, #tpu.memory_space<vmem>> -> memref<1x4x512xf32, #tpu.memory_space<vmem>>
    %72 = tpu.memref_squeeze %71 : memref<1x4x512xf32, #tpu.memory_space<vmem>> -> memref<4x512xf32, #tpu.memory_space<vmem>>
    %73 = tpu.memref_slice %arg6[%c3_i32_54] : memref<4x!tpu.dma_semaphore, #tpu.memory_space<semaphore_mem>> -> memref<1x!tpu.dma_semaphore, #tpu.memory_space<semaphore_mem>>
    %74 = tpu.memref_squeeze %73 : memref<1x!tpu.dma_semaphore, #tpu.memory_space<semaphore_mem>> -> memref<!tpu.dma_semaphore, #tpu.memory_space<semaphore_mem>>
    tpu.wait_dma2 semaphore(%74 : memref<!tpu.dma_semaphore, #tpu.memory_space<semaphore_mem>>) src(%70 : memref<4x512xf32, #tpu.memory_space<any>>) dst(%72 : memref<4x512xf32, #tpu.memory_space<vmem>>)
    %c0_59 = arith.constant 0 : index
    %c0_60 = arith.constant 0 : index
    %c0_61 = arith.constant 0 : index
    %75 = vector.load %arg5[%c0_59, %c0_60, %c0_61] : memref<4x4x512xf32, #tpu.memory_space<vmem>>, vector<4x4x512xf32>
    %c0_62 = arith.constant 0 : index
    %c5 = arith.constant 5 : index
    %c0_63 = arith.constant 0 : index
    %76 = vector.load %arg4[%c0_62, %c5, %c0_63] : memref<4x77x512xf32, #tpu.memory_space<vmem>>, vector<4x4x512xf32>
    tpu.vector_store %arg4[%c0_62, %c5, %c0_63], %75 {strides = array<i32>} : memref<4x77x512xf32, #tpu.memory_space<vmem>>, vector<4x4x512xf32>,
    return
  }
  func.func @transform_0(%arg0: i32, %arg1: memref<12xi32, #tpu.memory_space<smem>>) -> (i32, i32, i32) {
    %c0_i32 = arith.constant 0 : i32
    %c0_i32_0 = arith.constant 0 : i32
    %c0_i32_1 = arith.constant 0 : i32
    %c0_i32_2 = arith.constant 0 : i32
    return %c0_i32, %c0_i32_0, %c0_i32_1 : i32, i32, i32
  }
  func.func @transform_2(%arg0: i32, %arg1: memref<12xi32, #tpu.memory_space<smem>>) -> (i32, i32, i32) {
    %c0_i32 = arith.constant 0 : i32
    %c0_i32_0 = arith.constant 0 : i32
    %c0_i32_1 = arith.constant 0 : i32
    return %arg0, %c0_i32, %c0_i32_0 : i32, i32, i32
  }
}

</mosaic_0001>

<llo_original>
// kernel: tpu_custom_call.1
$region0: #{tpu_custom_call.1}
  #allocation0 [shape = 'u32[]', space=smem, size = 0x4, offset = 0x4, fixed_abs, tag = 'smem constant byte address 0x4 - core index']
  #allocation1 [shape = 'u32[144,128]{1,0:T(1,128)}', space=vmem, size = 0x12000, scoped, tag = 'internal scratch']
  #allocation2 [shape = 'f32[4,4,512]{2,1,0:T(4,128)}', space=vmem, size = 0x8000, scoped, tag = 'scratch operand']
  #allocation3 [shape = 's32[4]{0}', space=sflag, size = 0x10, scoped, tag = 'scratch operand']
  #allocation4 [shape = 's32[1]{0}', space=sflag, size = 0x4, scoped, tag = 'scoped memory for tpu_custom_call.1']
  #allocation5 [shape = 'u8[512]{0}', space=smem, size = 0x200, scoped, tag = 'prefetched SMEM operand 0']
  #allocation8 [shape = 's32[]', space=sflag, size = 0x4, offset = 0, fixed_abs, tag = 'sflag constant byte address 0x0 - dummy sync flag']
  #allocation9 [shape = 's32[]', space=sflag, size = 0x4, offset = 0, fixed_abs, tag = 'sflag constant byte address 0x0 - dummy sync flag']
  #allocation10 [shape = 'u32[]', space=smem, size = 0x4, offset = 0x44, fixed_abs, tag = 'smem constant byte address 0x44 - assertion arg 0']
  #allocation11 [shape = 'u32[]', space=smem, size = 0x4, offset = 0x48, fixed_abs, tag = 'smem constant byte address 0x48 - assertion arg 1']
  #allocation12 [shape = 's32[]', space=sflag, size = 0x4, offset = 0, fixed_abs, tag = 'sflag constant byte address 0x0 - dummy sync flag']
  #allocation13 [shape = 's32[]', space=sflag, size = 0x4, offset = 0, fixed_abs, tag = 'sflag constant byte address 0x0 - dummy sync flag']
  #allocation14 [shape = 's32[]', space=sflag, size = 0x4, offset = 0, fixed_abs, tag = 'sflag constant byte address 0x0 - dummy sync flag']
  #allocation15 [shape = 's32[]', space=sflag, size = 0x4, offset = 0, fixed_abs, tag = 'sflag constant byte address 0x0 - dummy sync flag']
  #allocation16 [shape = 's32[]', space=sflag, size = 0x4, offset = 0, fixed_abs, tag = 'sflag constant byte address 0x0 - dummy sync flag']
  #allocation17 [shape = 's32[]', space=sflag, size = 0x4, offset = 0, fixed_abs, tag = 'sflag constant byte address 0x0 - dummy sync flag']
  %s0 = inlined_call_operand.hbm [shape: s32[12], index: 0, kind: input, shape index: {}]
  %s1 = inlined_call_operand.vmem [shape: f32[1,77,512], index: 1, kind: input, shape index: {}]
  %s2 = inlined_call_operand.hbm [shape: f32[8,4,512], index: 2, kind: input, shape index: {}]
  %s3 = inlined_call_operand.hbm [shape: f32[12,77,512], index: 3, kind: output, shape index: {}]
  %s4 = sld [smem:[#allocation0]]
  $region53: #{tpu_custom_call.1} parent=0
    _
  %s6 = ssub.s32 1, %s4
  %s7 = scalar_select 0, %s6, %s4
  %9 = dma.hbm_to_smem %s0, 16, [#allocation5], [#allocation4]
  %10 = dma.done [#allocation4], 16
  %11 = sfence
  $region1: #{tpu_custom_call.1} parent=0
    #allocation6 [shape = 'u8[1310720]{0}', space=vmem, size = 0x140000, scoped, tag = 'output window, operand 0']
    #allocation7 [shape = 's32[2]{0}', space=sflag, size = 0x8, scoped, tag = 'scoped memory for tpu_custom_call.1']
    %12 = vsyncpa [#allocation7], 0
    %s13 = scalar_lea.sflag [#allocation7], 1
    %14 = vsyncpa %s13, 0
    loop: start=0, step=1, limit=5
    $region2: #{tpu_custom_call.1} parent=1 // loop_pre_header
      _
    $region3: #{tpu_custom_call.1} parent=1 // loop_header
      %s16 = sphi 0, %s20
      %p17 = scmp.ge.s32.totalorder %s16, 5
      %s24 = sphi 0, %s24
      %s26 = sphi 0, %s24
      %s27 = sphi 0, %s26
      %s41 = sphi 0, %s27
      %s47 = sphi 0, %s49
      %s50 = sphi 0, %s47
      %s51 = sphi 0, %s50
      %s67 = sphi 0, %s51
    $region4: #{tpu_custom_call.1} parent=1 // loop_header_branch
      %19 = sbr.rel (%p17) target = $region8
    $region5: #{tpu_custom_call.1} parent=1 // loop_body
      %s21 = ssub.s32 %s16, 1
      %s22 = ssub.s32 %s16, 2
      %s23 = sadd.s32 %s16, 1
      %s25 = sadd.s32 %s24, 1
      %p28 = scmp.eq.s32.totalorder %s16, 2
      %p29 = scmp.ne.s32.totalorder %s24, %s26
      %p30 = scmp.eq.s32.totalorder %s16, 0
      %p31 = por %p29, %p30
      %p32 = scmp.ne.s32.totalorder %s24, %s26
      %p33 = scmp.eq.s32.totalorder %s21, 2
      %p34 = por %p32, %p33
      %p35 = scmp.ne.s32.totalorder %s26, %s27
      %p36 = scmp.eq.s32.totalorder %s21, 0
      %p37 = por %p35, %p36
      %p38 = scmp.ne.s32.totalorder %s26, %s27
      %p39 = scmp.eq.s32.totalorder %s22, 2
      %p40 = por %p38, %p39
      %p42 = scmp.ne.s32.totalorder %s27, %s41
      %p43 = scmp.eq.s32.totalorder %s22, 0
      %p44 = por %p42, %p43
      %s45 = ssub.s32 %s16, %s23
      %p46 = scmp.eq.s32.totalorder %s45, 0
      %s48 = sadd.s32 %s47, 1
      %s49 = scalar_select %p46, %s47, %s48
      %p52 = pneg %p46
      %p53 = scmp.eq.s32.totalorder %s16, 2
      %p54 = por %p52, %p53
      %p55 = scmp.ne.s32.totalorder %s47, %s50
      %p56 = scmp.eq.s32.totalorder %s16, 0
      %p57 = por %p55, %p56
      %p58 = scmp.ne.s32.totalorder %s47, %s50
      %p59 = scmp.eq.s32.totalorder %s21, 2
      %p60 = por %p58, %p59
      %p61 = scmp.ne.s32.totalorder %s50, %s51
      %p62 = scmp.eq.s32.totalorder %s21, 0
      %p63 = por %p61, %p62
      %p64 = scmp.ne.s32.totalorder %s50, %s51
      %p65 = scmp.eq.s32.totalorder %s22, 2
      %p66 = por %p64, %p65
      %p68 = scmp.ne.s32.totalorder %s51, %s67
      %p69 = scmp.eq.s32.totalorder %s22, 0
      %p70 = por %p68, %p69
      %p71 = scmp.le.s32.totalorder 1, %s16
      %p72 = scmp.lt.s32.totalorder %s16, 4
      %p73 = pnand %p71, %p72
      %p74 = pneg %p73
      // Predicated region
      $region9: #{tpu_custom_call.1} parent=5 // pred_check
        _
      $region10: #{tpu_custom_call.1} parent=5 // pred_check_branch
        %76 = sbr.rel (%p73) target = $region12
      $region11: #{tpu_custom_call.1} parent=5 // pred_region
        %s77 = ssub.s32 %s16, 1
        // Predicated region
        $region13: #{tpu_custom_call.1} parent=11 // pred_check
          %p78 = pneg %p37
        $region14: #{tpu_custom_call.1} parent=11 // pred_check_branch
          %80 = sbr.rel (%p78) target = $region16
        $region15: #{tpu_custom_call.1} parent=11 // pred_region
          _
        $region16: #{tpu_custom_call.1} parent=11 // pred_fallthru
          _
      $region12: #{tpu_custom_call.1} parent=5 // pred_fallthru
        _
      %p81 = scmp.lt.s32.totalorder %s16, 3
      // Predicated region
      $region17: #{tpu_custom_call.1} parent=5 // pred_check
        %p82 = pneg %p81
      $region18: #{tpu_custom_call.1} parent=5 // pred_check_branch
        %84 = sbr.rel (%p82) target = $region20
      $region19: #{tpu_custom_call.1} parent=5 // pred_region
        _
      $region20: #{tpu_custom_call.1} parent=5 // pred_fallthru
        _
      %p85 = scmp.le.s32.totalorder 1, %s16
      %p86 = scmp.lt.s32.totalorder %s16, 4
      %p87 = pnand %p85, %p86
      %p88 = pneg %p87
      // Predicated region
      $region21: #{tpu_custom_call.1} parent=5 // pred_check
        _
      $region22: #{tpu_custom_call.1} parent=5 // pred_check_branch
        %90 = sbr.rel (%p87) target = $region24
      $region23: #{tpu_custom_call.1} parent=5 // pred_region
        %s91 = ssub.s32 %s16, 1
        %p92 = pneg %p37
        %p93 = pneg %p34
        %p94 = pneg %p63
        %p95 = pneg %p60
        %s96 = sand.u32 %s50, 1
        %s97 = scalar_lea.sflag [#allocation7], %s96
        %s98 = sand.u32 %s50, 1
        %s99 = smul.addr %s98, 1280
        %s100 = scalar_lea.vmem [#allocation6], %s99
        %s101 = smul.u32 4, %s21
        %s102 = smul.u32 %s21, 4
        %s103 = sld [smem:[#allocation5 + %s102]]
        %s104 = smul.u32 %s103, 4
        %s105 = smul.addr %s104, 64
        %s106 = scalar_lea.hbm %s2, %s105
        // Predicated region
        $region25: #{tpu_custom_call.1} parent=23 // pred_check
          _
        $region26: #{tpu_custom_call.1} parent=23 // pred_check_branch
          %108 = sbr.rel target = $region28
        $region27: #{tpu_custom_call.1} parent=23 // pred_region
          %109 = sst [smem:[#allocation10]] [#allocation9]
          %110 = sst [smem:[#allocation11]] [#allocation8]
        $region28: #{tpu_custom_call.1} parent=23 // pred_fallthru
          _
        %112 = shalt.err (0)
        %s114 = sshll.u32 [#allocation2], 4
        %s115 = int_to_ptr.vmem [resolvable:$true] %s114
        %117 = dma.hbm_to_vmem [thread:$0]  %s106, 256, %s115, [#allocation3]
        %s118 = sadd.s32 %s102, 1
        %s119 = sld [smem:[#allocation5 + %s118]]
        %s120 = smul.u32 %s119, 4
        %s121 = smul.addr %s120, 64
        %s122 = scalar_lea.hbm %s2, %s121
        %s123 = scalar_lea.vmem [#allocation2], 16
        %s124 = scalar_lea.sflag [#allocation3], 1
        // Predicated region
        $region29: #{tpu_custom_call.1} parent=23 // pred_check
          _
        $region30: #{tpu_custom_call.1} parent=23 // pred_check_branch
          %126 = sbr.rel target = $region32
        $region31: #{tpu_custom_call.1} parent=23 // pred_region
          %127 = sst [smem:[#allocation10]] [#allocation13]
          %128 = sst [smem:[#allocation11]] [#allocation12]
        $region32: #{tpu_custom_call.1} parent=23 // pred_fallthru
          _
        %130 = shalt.err (0)
        %s132 = sshll.u32 %s123, 4
        %s133 = int_to_ptr.vmem [resolvable:$true] %s132
        %135 = dma.hbm_to_vmem [thread:$0]  %s122, 256, %s133, %s124
        %s136 = sadd.s32 %s102, 2
        %s137 = sld [smem:[#allocation5 + %s136]]
        %s138 = smul.u32 %s137, 4
        %s139 = smul.addr %s138, 64
        %s140 = scalar_lea.hbm %s2, %s139
        %s141 = scalar_lea.vmem [#allocation2], 32
        %s142 = scalar_lea.sflag [#allocation3], 2
        // Predicated region
        $region33: #{tpu_custom_call.1} parent=23 // pred_check
          _
        $region34: #{tpu_custom_call.1} parent=23 // pred_check_branch
          %144 = sbr.rel target = $region36
        $region35: #{tpu_custom_call.1} parent=23 // pred_region
          %145 = sst [smem:[#allocation10]] [#allocation15]
          %146 = sst [smem:[#allocation11]] [#allocation14]
        $region36: #{tpu_custom_call.1} parent=23 // pred_fallthru
          _
        %148 = shalt.err (0)
        %s150 = sshll.u32 %s141, 4
        %s151 = int_to_ptr.vmem [resolvable:$true] %s150
        %153 = dma.hbm_to_vmem [thread:$0]  %s140, 256, %s151, %s142
        %s154 = sadd.s32 %s102, 3
        %s155 = sld [smem:[#allocation5 + %s154]]
        %s156 = smul.u32 %s155, 4
        %s157 = smul.addr %s156, 64
        %s158 = scalar_lea.hbm %s2, %s157
        %s159 = scalar_lea.vmem [#allocation2], 48
        %s160 = scalar_lea.sflag [#allocation3], 3
        // Predicated region
        $region37: #{tpu_custom_call.1} parent=23 // pred_check
          _
        $region38: #{tpu_custom_call.1} parent=23 // pred_check_branch
          %162 = sbr.rel target = $region40
        $region39: #{tpu_custom_call.1} parent=23 // pred_region
          %163 = sst [smem:[#allocation10]] [#allocation17]
          %164 = sst [smem:[#allocation11]] [#allocation16]
        $region40: #{tpu_custom_call.1} parent=23 // pred_fallthru
          _
        %166 = shalt.err (0)
        %s168 = sshll.u32 %s159, 4
        %s169 = int_to_ptr.vmem [resolvable:$true] %s168
        %171 = dma.hbm_to_vmem [thread:$0]  %s158, 256, %s169, %s160
        %v172 = vld [vmem:[%s1] sm:$0xff]
        %v173 = vld [vmem:[%s1 + $0x8] sm:$0xff]
        %v174 = vld [vmem:[%s1 + $0x10] sm:$0xff]
        %v175 = vld [vmem:[%s1 + $0x18] sm:$0xff]
        %v176 = vld [vmem:[%s1 + $0x20] sm:$0xff]
        %v177 = vld [vmem:[%s1 + $0x28] sm:$0xff]
        %v178 = vld [vmem:[%s1 + $0x30] sm:$0xff]
        %v179 = vld [vmem:[%s1 + $0x38] sm:$0xff]
        %v180 = vld [vmem:[%s1 + $0x40] sm:$0xff]
        %v181 = vld [vmem:[%s1 + $0x48] sm:$0xff]
        %v182 = vld [vmem:[%s1 + $0x50] sm:$0xff]
        %v183 = vld [vmem:[%s1 + $0x58] sm:$0xff]
        %v184 = vld [vmem:[%s1 + $0x60] sm:$0xff]
        %v185 = vld [vmem:[%s1 + $0x68] sm:$0xff]
        %v186 = vld [vmem:[%s1 + $0x70] sm:$0xff]
        %v187 = vld [vmem:[%s1 + $0x78] sm:$0xff]
        %v188 = vld [vmem:[%s1 + $0x80] sm:$0xff]
        %v189 = vld [vmem:[%s1 + $0x88] sm:$0xff]
        %v190 = vld [vmem:[%s1 + $0x90] sm:$0xff]
        %v191 = vld [vmem:[%s1 + $0x98] sm:$0xff]
        %v192 = vld [vmem:[%s1 + $0xa0] sm:$0xff]
        %v193 = vld [vmem:[%s1 + $0xa8] sm:$0xff]
        %v194 = vld [vmem:[%s1 + $0xb0] sm:$0xff]
        %v195 = vld [vmem:[%s1 + $0xb8] sm:$0xff]
        %v196 = vld [vmem:[%s1 + $0xc0] sm:$0xff]
        %v197 = vld [vmem:[%s1 + $0xc8] sm:$0xff]
        %v198 = vld [vmem:[%s1 + $0xd0] sm:$0xff]
        %v199 = vld [vmem:[%s1 + $0xd8] sm:$0xff]
        %v200 = vld [vmem:[%s1 + $0xe0] sm:$0xff]
        %v201 = vld [vmem:[%s1 + $0xe8] sm:$0xff]
        %v202 = vld [vmem:[%s1 + $0xf0] sm:$0xff]
        %v203 = vld [vmem:[%s1 + $0xf8] sm:$0xff]
        %v204 = vld [vmem:[%s1 + $0x100] sm:$0xff]
        %v205 = vld [vmem:[%s1 + $0x108] sm:$0xff]
        %v206 = vld [vmem:[%s1 + $0x110] sm:$0xff]
        %v207 = vld [vmem:[%s1 + $0x118] sm:$0xff]
        %v208 = vld [vmem:[%s1 + $0x120] sm:$0x1f]
        %v209 = vld [vmem:[%s1 + $0x128] sm:$0x1f]
        %v210 = vld [vmem:[%s1 + $0x130] sm:$0x1f]
        %v211 = vld [vmem:[%s1 + $0x138] sm:$0x1f]
        %212 = vst [vmem:[%s100] sm:$0xff] %v172
        %213 = vst [vmem:[%s100 + $0x8] sm:$0xff] %v173
        %214 = vst [vmem:[%s100 + $0x10] sm:$0xff] %v174
        %215 = vst [vmem:[%s100 + $0x18] sm:$0xff] %v175
        %216 = vst [vmem:[%s100 + $0x20] sm:$0xff] %v176
        %217 = vst [vmem:[%s100 + $0x28] sm:$0xff] %v177
        %218 = vst [vmem:[%s100 + $0x30] sm:$0xff] %v178
        %219 = vst [vmem:[%s100 + $0x38] sm:$0xff] %v179
        %220 = vst [vmem:[%s100 + $0x40] sm:$0xff] %v180
        %221 = vst [vmem:[%s100 + $0x48] sm:$0xff] %v181
        %222 = vst [vmem:[%s100 + $0x50] sm:$0xff] %v182
        %223 = vst [vmem:[%s100 + $0x58] sm:$0xff] %v183
        %224 = vst [vmem:[%s100 + $0x60] sm:$0xff] %v184
        %225 = vst [vmem:[%s100 + $0x68] sm:$0xff] %v185
        %226 = vst [vmem:[%s100 + $0x70] sm:$0xff] %v186
        %227 = vst [vmem:[%s100 + $0x78] sm:$0xff] %v187
        %228 = vst [vmem:[%s100 + $0x80] sm:$0xff] %v188
        %229 = vst [vmem:[%s100 + $0x88] sm:$0xff] %v189
        %230 = vst [vmem:[%s100 + $0x90] sm:$0xff] %v190
        %231 = vst [vmem:[%s100 + $0x98] sm:$0xff] %v191
        %232 = vst [vmem:[%s100 + $0xa0] sm:$0xff] %v192
        %233 = vst [vmem:[%s100 + $0xa8] sm:$0xff] %v193
        %234 = vst [vmem:[%s100 + $0xb0] sm:$0xff] %v194
        %235 = vst [vmem:[%s100 + $0xb8] sm:$0xff] %v195
        %236 = vst [vmem:[%s100 + $0xc0] sm:$0xff] %v196
        %237 = vst [vmem:[%s100 + $0xc8] sm:$0xff] %v197
        %238 = vst [vmem:[%s100 + $0xd0] sm:$0xff] %v198
        %239 = vst [vmem:[%s100 + $0xd8] sm:$0xff] %v199
        %240 = vst [vmem:[%s100 + $0xe0] sm:$0xff] %v200
        %241 = vst [vmem:[%s100 + $0xe8] sm:$0xff] %v201
        %242 = vst [vmem:[%s100 + $0xf0] sm:$0xff] %v202
        %243 = vst [vmem:[%s100 + $0xf8] sm:$0xff] %v203
        %244 = vst [vmem:[%s100 + $0x100] sm:$0xff] %v204
        %245 = vst [vmem:[%s100 + $0x108] sm:$0xff] %v205
        %246 = vst [vmem:[%s100 + $0x110] sm:$0xff] %v206
        %247 = vst [vmem:[%s100 + $0x118] sm:$0xff] %v207
        %248 = vst [vmem:[%s100 + $0x120] sm:$0x1f] %v208
        %249 = vst [vmem:[%s100 + $0x128] sm:$0x1f] %v209
        %250 = vst [vmem:[%s100 + $0x130] sm:$0x1f] %v210
        %251 = vst [vmem:[%s100 + $0x138] sm:$0x1f] %v211
        %s252 = scalar_lea.vmem %s100, 320 [#allocation6]
        %253 = vst [vmem:[%s252] sm:$0xff] %v172
        %254 = vst [vmem:[%s252 + $0x8] sm:$0xff] %v173
        %255 = vst [vmem:[%s252 + $0x10] sm:$0xff] %v174
        %256 = vst [vmem:[%s252 + $0x18] sm:$0xff] %v175
        %257 = vst [vmem:[%s252 + $0x20] sm:$0xff] %v176
        %258 = vst [vmem:[%s252 + $0x28] sm:$0xff] %v177
        %259 = vst [vmem:[%s252 + $0x30] sm:$0xff] %v178
        %260 = vst [vmem:[%s252 + $0x38] sm:$0xff] %v179
        %261 = vst [vmem:[%s252 + $0x40] sm:$0xff] %v180
        %262 = vst [vmem:[%s252 + $0x48] sm:$0xff] %v181
        %263 = vst [vmem:[%s252 + $0x50] sm:$0xff] %v182
        %264 = vst [vmem:[%s252 + $0x58] sm:$0xff] %v183
        %265 = vst [vmem:[%s252 + $0x60] sm:$0xff] %v184
        %266 = vst [vmem:[%s252 + $0x68] sm:$0xff] %v185
        %267 = vst [vmem:[%s252 + $0x70] sm:$0xff] %v186
        %268 = vst [vmem:[%s252 + $0x78] sm:$0xff] %v187
        %269 = vst [vmem:[%s252 + $0x80] sm:$0xff] %v188
        %270 = vst [vmem:[%s252 + $0x88] sm:$0xff] %v189
        %271 = vst [vmem:[%s252 + $0x90] sm:$0xff] %v190
        %272 = vst [vmem:[%s252 + $0x98] sm:$0xff] %v191
        %273 = vst [vmem:[%s252 + $0xa0] sm:$0xff] %v192
        %274 = vst [vmem:[%s252 + $0xa8] sm:$0xff] %v193
        %275 = vst [vmem:[%s252 + $0xb0] sm:$0xff] %v194
        %276 = vst [vmem:[%s252 + $0xb8] sm:$0xff] %v195
        %277 = vst [vmem:[%s252 + $0xc0] sm:$0xff] %v196
        %278 = vst [vmem:[%s252 + $0xc8] sm:$0xff] %v197
        %279 = vst [vmem:[%s252 + $0xd0] sm:$0xff] %v198
        %280 = vst [vmem:[%s252 + $0xd8] sm:$0xff] %v199
        %281 = vst [vmem:[%s252 + $0xe0] sm:$0xff] %v200
        %282 = vst [vmem:[%s252 + $0xe8] sm:$0xff] %v201
        %283 = vst [vmem:[%s252 + $0xf0] sm:$0xff] %v202
        %284 = vst [vmem:[%s252 + $0xf8] sm:$0xff] %v203
        %285 = vst [vmem:[%s252 + $0x100] sm:$0xff] %v204
        %286 = vst [vmem:[%s252 + $0x108] sm:$0xff] %v205
        %287 = vst [vmem:[%s252 + $0x110] sm:$0xff] %v206
        %288 = vst [vmem:[%s252 + $0x118] sm:$0xff] %v207
        %289 = vst [vmem:[%s252 + $0x120] sm:$0x1f] %v208
        %290 = vst [vmem:[%s252 + $0x128] sm:$0x1f] %v209
        %291 = vst [vmem:[%s252 + $0x130] sm:$0x1f] %v210
        %292 = vst [vmem:[%s252 + $0x138] sm:$0x1f] %v211
        %s293 = scalar_lea.vmem %s100, 640 [#allocation6]
        %294 = vst [vmem:[%s293] sm:$0xff] %v172
        %295 = vst [vmem:[%s293 + $0x8] sm:$0xff] %v173
        %296 = vst [vmem:[%s293 + $0x10] sm:$0xff] %v174
        %297 = vst [vmem:[%s293 + $0x18] sm:$0xff] %v175
        %298 = vst [vmem:[%s293 + $0x20] sm:$0xff] %v176
        %299 = vst [vmem:[%s293 + $0x28] sm:$0xff] %v177
        %300 = vst [vmem:[%s293 + $0x30] sm:$0xff] %v178
        %301 = vst [vmem:[%s293 + $0x38] sm:$0xff] %v179
        %302 = vst [vmem:[%s293 + $0x40] sm:$0xff] %v180
        %303 = vst [vmem:[%s293 + $0x48] sm:$0xff] %v181
        %304 = vst [vmem:[%s293 + $0x50] sm:$0xff] %v182
        %305 = vst [vmem:[%s293 + $0x58] sm:$0xff] %v183
        %306 = vst [vmem:[%s293 + $0x60] sm:$0xff] %v184
        %307 = vst [vmem:[%s293 + $0x68] sm:$0xff] %v185
        %308 = vst [vmem:[%s293 + $0x70] sm:$0xff] %v186
        %309 = vst [vmem:[%s293 + $0x78] sm:$0xff] %v187
        %310 = vst [vmem:[%s293 + $0x80] sm:$0xff] %v188
        %311 = vst [vmem:[%s293 + $0x88] sm:$0xff] %v189
        %312 = vst [vmem:[%s293 + $0x90] sm:$0xff] %v190
        %313 = vst [vmem:[%s293 + $0x98] sm:$0xff] %v191
        %314 = vst [vmem:[%s293 + $0xa0] sm:$0xff] %v192
        %315 = vst [vmem:[%s293 + $0xa8] sm:$0xff] %v193
        %316 = vst [vmem:[%s293 + $0xb0] sm:$0xff] %v194
        %317 = vst [vmem:[%s293 + $0xb8] sm:$0xff] %v195
        %318 = vst [vmem:[%s293 + $0xc0] sm:$0xff] %v196
        %319 = vst [vmem:[%s293 + $0xc8] sm:$0xff] %v197
        %320 = vst [vmem:[%s293 + $0xd0] sm:$0xff] %v198
        %321 = vst [vmem:[%s293 + $0xd8] sm:$0xff] %v199
        %322 = vst [vmem:[%s293 + $0xe0] sm:$0xff] %v200
        %323 = vst [vmem:[%s293 + $0xe8] sm:$0xff] %v201
        %324 = vst [vmem:[%s293 + $0xf0] sm:$0xff] %v202
        %325 = vst [vmem:[%s293 + $0xf8] sm:$0xff] %v203
        %326 = vst [vmem:[%s293 + $0x100] sm:$0xff] %v204
        %327 = vst [vmem:[%s293 + $0x108] sm:$0xff] %v205
        %328 = vst [vmem:[%s293 + $0x110] sm:$0xff] %v206
        %329 = vst [vmem:[%s293 + $0x118] sm:$0xff] %v207
        %330 = vst [vmem:[%s293 + $0x120] sm:$0x1f] %v208
        %331 = vst [vmem:[%s293 + $0x128] sm:$0x1f] %v209
        %332 = vst [vmem:[%s293 + $0x130] sm:$0x1f] %v210
        %333 = vst [vmem:[%s293 + $0x138] sm:$0x1f] %v211
        %s334 = scalar_lea.vmem %s100, 960 [#allocation6]
        %335 = vst [vmem:[%s334] sm:$0xff] %v172
        %336 = vst [vmem:[%s334 + $0x8] sm:$0xff] %v173
        %337 = vst [vmem:[%s334 + $0x10] sm:$0xff] %v174
        %338 = vst [vmem:[%s334 + $0x18] sm:$0xff] %v175
        %339 = vst [vmem:[%s334 + $0x20] sm:$0xff] %v176
        %340 = vst [vmem:[%s334 + $0x28] sm:$0xff] %v177
        %341 = vst [vmem:[%s334 + $0x30] sm:$0xff] %v178
        %342 = vst [vmem:[%s334 + $0x38] sm:$0xff] %v179
        %343 = vst [vmem:[%s334 + $0x40] sm:$0xff] %v180
        %344 = vst [vmem:[%s334 + $0x48] sm:$0xff] %v181
        %345 = vst [vmem:[%s334 + $0x50] sm:$0xff] %v182
        %346 = vst [vmem:[%s334 + $0x58] sm:$0xff] %v183
        %347 = vst [vmem:[%s334 + $0x60] sm:$0xff] %v184
        %348 = vst [vmem:[%s334 + $0x68] sm:$0xff] %v185
        %349 = vst [vmem:[%s334 + $0x70] sm:$0xff] %v186
        %350 = vst [vmem:[%s334 + $0x78] sm:$0xff] %v187
        %351 = vst [vmem:[%s334 + $0x80] sm:$0xff] %v188
        %352 = vst [vmem:[%s334 + $0x88] sm:$0xff] %v189
        %353 = vst [vmem:[%s334 + $0x90] sm:$0xff] %v190
        %354 = vst [vmem:[%s334 + $0x98] sm:$0xff] %v191
        %355 = vst [vmem:[%s334 + $0xa0] sm:$0xff] %v192
        %356 = vst [vmem:[%s334 + $0xa8] sm:$0xff] %v193
        %357 = vst [vmem:[%s334 + $0xb0] sm:$0xff] %v194
        %358 = vst [vmem:[%s334 + $0xb8] sm:$0xff] %v195
        %359 = vst [vmem:[%s334 + $0xc0] sm:$0xff] %v196
        %360 = vst [vmem:[%s334 + $0xc8] sm:$0xff] %v197
        %361 = vst [vmem:[%s334 + $0xd0] sm:$0xff] %v198
        %362 = vst [vmem:[%s334 + $0xd8] sm:$0xff] %v199
        %363 = vst [vmem:[%s334 + $0xe0] sm:$0xff] %v200
        %364 = vst [vmem:[%s334 + $0xe8] sm:$0xff] %v201
        %365 = vst [vmem:[%s334 + $0xf0] sm:$0xff] %v202
        %366 = vst [vmem:[%s334 + $0xf8] sm:$0xff] %v203
        %367 = vst [vmem:[%s334 + $0x100] sm:$0xff] %v204
        %368 = vst [vmem:[%s334 + $0x108] sm:$0xff] %v205
        %369 = vst [vmem:[%s334 + $0x110] sm:$0xff] %v206
        %370 = vst [vmem:[%s334 + $0x118] sm:$0xff] %v207
        %371 = vst [vmem:[%s334 + $0x120] sm:$0x1f] %v208
        %372 = vst [vmem:[%s334 + $0x128] sm:$0x1f] %v209
        %373 = vst [vmem:[%s334 + $0x130] sm:$0x1f] %v210
        %374 = vst [vmem:[%s334 + $0x138] sm:$0x1f] %v211
        %s375 = smul.u32 4, 1
        %s376 = smul.u32 %s375, 4
        %s377 = sshll.u32 %s376, 4
        %378 = dma.done [#allocation3], %s377
        %s379 = sshll.u32 %s376, 4
        %380 = dma.done %s124, %s379
        %s381 = sshll.u32 %s376, 4
        %382 = dma.done %s142, %s381
        %s383 = sshll.u32 %s376, 4
        %384 = dma.done %s160, %s383
        %v385 = vld [vmem:[#allocation2] sm:$0xff]
        %v386 = vld [vmem:[#allocation2 + $0x8] sm:$0xff]
        %v387 = vld [vmem:[#allocation2 + $0x10] sm:$0xff]
        %v388 = vld [vmem:[#allocation2 + $0x18] sm:$0xff]
        %v389 = vld [vmem:[#allocation2 + $0x20] sm:$0xff]
        %v390 = vld [vmem:[#allocation2 + $0x28] sm:$0xff]
        %v391 = vld [vmem:[#allocation2 + $0x30] sm:$0xff]
        %v392 = vld [vmem:[#allocation2 + $0x38] sm:$0xff]
        %v401 = vcombine.high %v385, %v385
        %v402 = vcombine.high %v386, %v386
        %v403 = vcombine.high %v387, %v387
        %v404 = vcombine.high %v388, %v388
        %v405 = vcombine.high %v389, %v389
        %v406 = vcombine.high %v390, %v390
        %v407 = vcombine.high %v391, %v391
        %v408 = vcombine.high %v392, %v392
        %v409 = vrot.slane %v385, 3
        %v410 = vrot.slane %v401, 3
        %v411 = vrot.slane %v386, 3
        %v412 = vrot.slane %v402, 3
        %v413 = vrot.slane %v387, 3
        %v414 = vrot.slane %v403, 3
        %v415 = vrot.slane %v388, 3
        %v416 = vrot.slane %v404, 3
        %v417 = vrot.slane %v389, 3
        %v418 = vrot.slane %v405, 3
        %v419 = vrot.slane %v390, 3
        %v420 = vrot.slane %v406, 3
        %v421 = vrot.slane %v391, 3
        %v422 = vrot.slane %v407, 3
        %v423 = vrot.slane %v392, 3
        %v424 = vrot.slane %v408, 3
        %441 = vst [vmem:[%s100] sm:$0xe0] %v409
        %442 = vst [vmem:[%s100 + $0x8] sm:$0xe0] %v410
        %443 = vst [vmem:[%s100 + $0x10] sm:$0xe0] %v411
        %444 = vst [vmem:[%s100 + $0x18] sm:$0xe0] %v412
        %445 = vst [vmem:[%s100 + $0x20] sm:$0x1] %v409
        %446 = vst [vmem:[%s100 + $0x28] sm:$0x1] %v410
        %447 = vst [vmem:[%s100 + $0x30] sm:$0x1] %v411
        %448 = vst [vmem:[%s100 + $0x38] sm:$0x1] %v412
        %449 = vst [vmem:[%s100 + $0x140] sm:$0xe0] %v413
        %450 = vst [vmem:[%s100 + $0x148] sm:$0xe0] %v414
        %451 = vst [vmem:[%s100 + $0x150] sm:$0xe0] %v415
        %452 = vst [vmem:[%s100 + $0x158] sm:$0xe0] %v416
        %453 = vst [vmem:[%s100 + $0x160] sm:$0x1] %v413
        %454 = vst [vmem:[%s100 + $0x168] sm:$0x1] %v414
        %455 = vst [vmem:[%s100 + $0x170] sm:$0x1] %v415
        %456 = vst [vmem:[%s100 + $0x178] sm:$0x1] %v416
        %457 = vst [vmem:[%s100 + $0x280] sm:$0xe0] %v417
        %458 = vst [vmem:[%s100 + $0x288] sm:$0xe0] %v418
        %459 = vst [vmem:[%s100 + $0x290] sm:$0xe0] %v419
        %460 = vst [vmem:[%s100 + $0x298] sm:$0xe0] %v420
        %461 = vst [vmem:[%s100 + $0x2a0] sm:$0x1] %v417
        %462 = vst [vmem:[%s100 + $0x2a8] sm:$0x1] %v418
        %463 = vst [vmem:[%s100 + $0x2b0] sm:$0x1] %v419
        %464 = vst [vmem:[%s100 + $0x2b8] sm:$0x1] %v420
        %465 = vst [vmem:[%s100 + $0x3c0] sm:$0xe0] %v421
        %466 = vst [vmem:[%s100 + $0x3c8] sm:$0xe0] %v422
        %467 = vst [vmem:[%s100 + $0x3d0] sm:$0xe0] %v423
        %468 = vst [vmem:[%s100 + $0x3d8] sm:$0xe0] %v424
        %469 = vst [vmem:[%s100 + $0x3e0] sm:$0x1] %v421
        %470 = vst [vmem:[%s100 + $0x3e8] sm:$0x1] %v422
        %471 = vst [vmem:[%s100 + $0x3f0] sm:$0x1] %v423
        %472 = vst [vmem:[%s100 + $0x3f8] sm:$0x1] %v424
        %s473 = sand.u32 %s50, 1
        %s474 = scalar_lea.sflag [#allocation7], %s473
        %s475 = sand.u32 %s50, 1
        %s476 = smul.addr %s475, 1280
        %s477 = scalar_lea.vmem [#allocation6], %s476
        // Predicated region
        $region41: #{tpu_custom_call.1} parent=23 // pred_check
          %p478 = pneg %p60
        $region42: #{tpu_custom_call.1} parent=23 // pred_check_branch
          %480 = sbr.rel (%p478) target = $region44
        $region43: #{tpu_custom_call.1} parent=23 // pred_region
          %s481 = smul.u32 4, %s21
          %s483 = ssub.s32 20480, 20480
          %484 = vsyncadd %s474, %s483
          %s485 = smul.addr %s481, 40
          %s486 = smul.addr %s485, 128
          %s487 = scalar_lea.hbm %s3, %s486
          %s488 = sshll.u32 %s477, 4
          %s489 = int_to_ptr.vmem [resolvable:$true] %s488
          %494 = dma.vmem_to_hbm [thread:$0]  %s489, 20480, %s487, %s474, 512, 512, 32
        $region44: #{tpu_custom_call.1} parent=23 // pred_fallthru
          _
      $region24: #{tpu_custom_call.1} parent=5 // pred_fallthru
        _
      %p495 = scmp.le.s32.totalorder 2, %s16
      // Predicated region
      $region45: #{tpu_custom_call.1} parent=5 // pred_check
        %p496 = pneg %p495
      $region46: #{tpu_custom_call.1} parent=5 // pred_check_branch
        %498 = sbr.rel (%p496) target = $region48
      $region47: #{tpu_custom_call.1} parent=5 // pred_region
        %s499 = ssub.s32 %s16, 2
        // Predicated region
        $region49: #{tpu_custom_call.1} parent=47 // pred_check
          %p500 = pneg %p66
        $region50: #{tpu_custom_call.1} parent=47 // pred_check_branch
          %502 = sbr.rel (%p500) target = $region52
        $region51: #{tpu_custom_call.1} parent=47 // pred_region
          %s503 = sand.u32 %s51, 1
          %s504 = scalar_lea.sflag [#allocation7], %s503
          %s505 = sand.u32 %s51, 1
          %s506 = smul.addr %s505, 1280
          %s507 = scalar_lea.vmem [#allocation6], %s506
          %508 = dma.done %s504, 20480
        $region52: #{tpu_custom_call.1} parent=47 // pred_fallthru
          _
      $region48: #{tpu_custom_call.1} parent=5 // pred_fallthru
        _
    $region6: #{tpu_custom_call.1} parent=1 // loop_footer
      %s20 = sadd.s32 1, %s16
    $region7: #{tpu_custom_call.1} parent=1 // loop_footer_branch
      %15 = sbr.rel target = $region3
    $region8: #{tpu_custom_call.1} parent=1 // loop_exit
      _
    %509 = vsyncpa [#allocation7], 1
    %s510 = scalar_lea.sflag [#allocation7], 1
    %511 = vsyncpa %s510, 1
  %512 = vsyncmov [#allocation3]
  %s513 = vpop.sfrf %512
  %p514 = scmp.eq.s32.totalorder %s513, 0
  %p515 = pneg %p514
  %517 = shalt.err (%p515)
  %s518 = scalar_lea.sflag [#allocation3], 1
  %519 = vsyncmov %s518
  %s520 = vpop.sfrf %519
  %p521 = scmp.eq.s32.totalorder %s520, 0
  %p522 = pneg %p521
  %524 = shalt.err (%p522)
  %s525 = scalar_lea.sflag [#allocation3], 2
  %526 = vsyncmov %s525
  %s527 = vpop.sfrf %526
  %p528 = scmp.eq.s32.totalorder %s527, 0
  %p529 = pneg %p528
  %531 = shalt.err (%p529)
  %s532 = scalar_lea.sflag [#allocation3], 3
  %533 = vsyncmov %s532
  %s534 = vpop.sfrf %533
  %p535 = scmp.eq.s32.totalorder %s534, 0
  %p536 = pneg %p535
  %538 = shalt.err (%p536)

</llo_original>
